<compile_context>
chip_gen: v7x
topology: tpu7x:2x2x1
jax: 0.10.0
libtpu: 0.0.40
codegen_flags: <defaults>
</compile_context>

<pallas_src>
import functools

import jax
import jax.numpy as jnp
import numpy as np
from jax.experimental import pallas as pl
from jax.experimental.pallas import tpu as pltpu

EPS = 1e-5


# ---------------------------------------------------------------------------
# Generation-aware compiler params (v5e/v6e: 128 MiB VMEM, v7x: 64 MiB)
# ---------------------------------------------------------------------------
def _compiler_params(dimension_semantics):
    kwargs = dict(dimension_semantics=dimension_semantics)
    try:
        cap = pltpu.get_tpu_info().vmem_capacity_bytes
        # ~3/4 of physical VMEM (v5e/v6e -> ~96 MiB, v7x -> 48 MiB).
        kwargs["vmem_limit_bytes"] = int(min(cap * 3 // 4, 100 * 1024 * 1024))
    except Exception:
        pass  # fall back to the default scoped VMEM limit
    return pltpu.CompilerParams(**kwargs)


# ---------------------------------------------------------------------------
# Fused bottleneck block kernel (stride 1): whole a->b->c chain in VMEM
# ---------------------------------------------------------------------------
def _fused_block_kernel(b2_ref, res_ref,
                        a_w_ref, a_s_ref, a_b_ref,
                        b_w_ref, b_s_ref, b_b_ref,
                        c_w_ref, c_s_ref, c_b_ref,
                        o_ref, a_pad_ref, *, H, W, d):
    """One batch image per grid step.  b2_ref: (H,W,Cin) bf16, res_ref: (H,W,Cout) bf16,
    weights bf16, BN scale/shift f32.  a_pad_ref: (H+2d, W+2d, Di) bf16 VMEM halo."""
    Cin = b2_ref.shape[-1]
    Di = a_w_ref.shape[-1]
    Cout = c_w_ref.shape[-1]
    M = H * W

    # ---- a: 1x1 conv + folded BN + ReLU (f32 accumulation on the MXU) -------
    a = jnp.dot(b2_ref[...].reshape(M, Cin), a_w_ref[...],
                preferred_element_type=jnp.float32)
    a = jnp.maximum(a * a_s_ref[...] + a_b_ref[...], 0.0)

    # Write 'a' into the zero-padded VMEM halo buffer (bf16 feeds the 3x3 MXU GEMMs).
    a_pad_ref[...] = jnp.zeros(a_pad_ref.shape, a_pad_ref.dtype)
    a_pad_ref[pl.ds(d, H), pl.ds(d, W), :] = a.astype(jnp.bfloat16).reshape(H, W, Di)

    # ---- b: 3x3 conv (stride 1, dilation d) as 9 shifted GEMMs --------------
    # TODO(synk): W that is a multiple of 8 keeps the (H,W,Di)<->(H*W,Di) reshapes free.
    bacc = jnp.zeros((M, Di), jnp.float32)
    for kh in range(3):
        for kw in range(3):
            tap = a_pad_ref[pl.ds(kh * d, H), pl.ds(kw * d, W), :]
            bacc = bacc + jnp.dot(tap.reshape(M, Di), b_w_ref[kh * 3 + kw],
                                  preferred_element_type=jnp.float32)
    b = jnp.maximum(bacc * b_s_ref[...] + b_b_ref[...], 0.0).astype(jnp.bfloat16)

    # ---- c: 1x1 conv + folded BN, fused residual add + final ReLU -----------
    y = jnp.dot(b, c_w_ref[...], preferred_element_type=jnp.float32)
    y = y * c_s_ref[...] + c_b_ref[...]
    y = y + res_ref[...].reshape(M, Cout).astype(jnp.float32)
    o_ref[...] = jnp.maximum(y, 0.0).reshape(H, W, Cout).astype(o_ref.dtype)


def fused_bottleneck_block(b2_nhwc, res_nhwc, p, *, dilation=1, out_dtype=jnp.float32):
    """Whole stride-1 bottleneck block as a single pallas_call, grid over batch."""
    N, H, W, Cin = b2_nhwc.shape
    Di = p['a_w'].shape[1]
    Cout = p['c_w'].shape[1]
    d = dilation
    Hp, Wp = H + 2 * d, W + 2 * d

    b2 = b2_nhwc.astype(jnp.bfloat16)
    res = res_nhwc.astype(jnp.bfloat16)
    a_s = p['a_scale'].reshape(1, Di).astype(jnp.float32)
    a_b = p['a_shift'].reshape(1, Di).astype(jnp.float32)
    b_s = p['b_scale'].reshape(1, Di).astype(jnp.float32)
    b_b = p['b_shift'].reshape(1, Di).astype(jnp.float32)
    c_s = p['c_scale'].reshape(1, Cout).astype(jnp.float32)
    c_b = p['c_shift'].reshape(1, Cout).astype(jnp.float32)

    flops = 2 * N * H * W * (Cin * Di + 9 * Di * Di + Di * Cout)
    bytes_acc = int(N * H * W * (Cin + Cout) * 2
                    + N * H * W * Cout * jnp.dtype(out_dtype).itemsize
                    + (Cin * Di + 9 * Di * Di + Di * Cout) * 2
                    + 4 * (4 * Di + 2 * Cout))

    out = pl.pallas_call(
        functools.partial(_fused_block_kernel, H=H, W=W, d=d),
        grid=(N,),
        in_specs=[
            pl.BlockSpec((None, H, W, Cin), lambda n: (n, 0, 0, 0)),
            pl.BlockSpec((None, H, W, Cout), lambda n: (n, 0, 0, 0)),
            pl.BlockSpec((Cin, Di), lambda n: (0, 0)),
            pl.BlockSpec((1, Di), lambda n: (0, 0)),
            pl.BlockSpec((1, Di), lambda n: (0, 0)),
            pl.BlockSpec((9, Di, Di), lambda n: (0, 0, 0)),
            pl.BlockSpec((1, Di), lambda n: (0, 0)),
            pl.BlockSpec((1, Di), lambda n: (0, 0)),
            pl.BlockSpec((Di, Cout), lambda n: (0, 0)),
            pl.BlockSpec((1, Cout), lambda n: (0, 0)),
            pl.BlockSpec((1, Cout), lambda n: (0, 0)),
        ],
        out_specs=pl.BlockSpec((None, H, W, Cout), lambda n: (n, 0, 0, 0)),
        out_shape=jax.ShapeDtypeStruct((N, H, W, Cout), out_dtype),
        scratch_shapes=[pltpu.VMEM((Hp, Wp, Di), jnp.bfloat16)],
        compiler_params=_compiler_params(("parallel",)),
        cost_estimate=pl.CostEstimate(flops=flops, transcendentals=0,
                                      bytes_accessed=bytes_acc),
    )(b2, res, p['a_w'], a_s, a_b, p['b_w3x3'], b_s, b_b, p['c_w'], c_s, c_b)
    return out


# ---------------------------------------------------------------------------
# Fallback: tiled GEMM + folded-BN / residual / ReLU epilogue (strided blocks)
# ---------------------------------------------------------------------------
def _gemm_bn_epilogue(acc, s_ref, b_ref, res_ref, relu, out_dtype):
    y = acc * s_ref[...] + b_ref[...]
    if res_ref is not None:
        y = y + res_ref[...].astype(jnp.float32)
    if relu:
        y = jnp.maximum(y, 0.0)
    return y.astype(out_dtype)


def _gemm_bn_kernel_single_k(x_ref, w_ref, s_ref, b_ref, *rest, relu, has_res):
    """grid = (m_tiles,): single K block -> no accumulator scratch, direct store."""
    if has_res:
        res_ref, o_ref = rest
    else:
        (o_ref,) = rest
        res_ref = None
    acc = jnp.dot(x_ref[...], w_ref[...], preferred_element_type=jnp.float32)
    o_ref[...] = _gemm_bn_epilogue(acc, s_ref, b_ref, res_ref, relu, o_ref.dtype)


def _gemm_bn_kernel_multi_k(x_ref, w_ref, s_ref, b_ref, *rest, relu, has_res):
    """grid = (m_tiles, k_tiles): f32 VMEM accumulator, epilogue at the last k step."""
    if has_res:
        res_ref, o_ref, acc_ref = rest
    else:
        o_ref, acc_ref = rest
        res_ref = None

    @pl.when(pl.program_id(1) == 0)
    def _init():
        acc_ref[...] = jnp.zeros_like(acc_ref)

    acc_ref[...] += jnp.dot(x_ref[...], w_ref[...], preferred_element_type=jnp.float32)

    @pl.when(pl.program_id(1) == pl.num_programs(1) - 1)
    def _finalize():
        o_ref[...] = _gemm_bn_epilogue(acc_ref[...], s_ref, b_ref, res_ref, relu,
                                       o_ref.dtype)


def _choose_tile_m(m):
    # Largest tile that divides M while leaving >= 2 m-tiles, so the "parallel" axis can
    # shard across v7x's two TensorCores and pipeline the input/output DMAs.
    for t in (1024, 512, 256, 128, 64, 32, 16, 8):
        if m % t == 0 and m // t >= 2:
            return t
    for t in (1024, 512, 256, 128, 64, 32, 16, 8):
        if m % t == 0:
            return t
    # TODO(synk): pad M (with masking) instead of a single full-extent tile for awkward M.
    return m


def _choose_tile_k(k, cout, tm):
    # Keep the weight a single K block (constant index_map -> fetched once) unless the
    # bf16 x-tile + weight panel would genuinely pressure VMEM; then tile lane-aligned.
    if k % 128 == 0 and 2 * k * (cout + tm) > 8 * 1024 * 1024:
        for t in (1024, 512, 256, 128):
            if k % t == 0:
                return t
    return k


def _gemm_bn(x2d, w, scale, shift, *, relu, residual=None, out_dtype=jnp.float32):
    """(M, K) @ (K, Cout) with fused folded-BN affine / residual / ReLU epilogue."""
    M, K = x2d.shape
    K2, Cout = w.shape
    assert K == K2, (K, K2)
    tm = _choose_tile_m(M)
    tk = _choose_tile_k(K, Cout, tm)

    x_bf = x2d.astype(jnp.bfloat16)
    w_bf = w.astype(jnp.bfloat16)
    scale2d = scale.reshape(1, Cout).astype(jnp.float32)
    shift2d = shift.reshape(1, Cout).astype(jnp.float32)
    has_res = residual is not None

    args = [x_bf, w_bf, scale2d, shift2d]
    res_bytes = 0
    if has_res:
        res2d = residual.reshape(M, Cout)
        args.append(res2d)
        res_bytes = M * Cout * jnp.dtype(res2d.dtype).itemsize
    out_bytes = M * Cout * jnp.dtype(out_dtype).itemsize
    cost = pl.CostEstimate(
        flops=2 * M * K * Cout, transcendentals=0,
        bytes_accessed=2 * M * K + 2 * K * Cout + 8 * Cout + res_bytes + out_bytes)

    if tk == K:
        # Single K block: no accumulator scratch, weight fetched once.
        in_specs = [
            pl.BlockSpec((tm, K), lambda i: (i, 0)),
            pl.BlockSpec((K, Cout), lambda i: (0, 0)),
            pl.BlockSpec((1, Cout), lambda i: (0, 0)),
            pl.BlockSpec((1, Cout), lambda i: (0, 0)),
        ]
        if has_res:
            in_specs.append(pl.BlockSpec((tm, Cout), lambda i: (i, 0)))
        return pl.pallas_call(
            functools.partial(_gemm_bn_kernel_single_k, relu=relu, has_res=has_res),
            grid=(M // tm,),
            in_specs=in_specs,
            out_specs=pl.BlockSpec((tm, Cout), lambda i: (i, 0)),
            out_shape=jax.ShapeDtypeStruct((M, Cout), out_dtype),
            compiler_params=_compiler_params(("parallel",)),
            cost_estimate=cost,
        )(*args)

    # Large-K path: reduction axis innermost with f32 VMEM accumulator.
    in_specs = [
        pl.BlockSpec((tm, tk), lambda i, k: (i, k)),
        pl.BlockSpec((tk, Cout), lambda i, k: (k, 0)),
        pl.BlockSpec((1, Cout), lambda i, k: (0, 0)),
        pl.BlockSpec((1, Cout), lambda i, k: (0, 0)),
    ]
    if has_res:
        in_specs.append(pl.BlockSpec((tm, Cout), lambda i, k: (i, 0)))
    return pl.pallas_call(
        functools.partial(_gemm_bn_kernel_multi_k, relu=relu, has_res=has_res),
        grid=(M // tm, K // tk),
        in_specs=in_specs,
        out_specs=pl.BlockSpec((tm, Cout), lambda i, k: (i, 0)),
        out_shape=jax.ShapeDtypeStruct((M, Cout), out_dtype),
        scratch_shapes=[pltpu.VMEM((tm, Cout), jnp.float32)],
        compiler_params=_compiler_params(("parallel", "arbitrary")),
        cost_estimate=cost,
    )(*args)


# ---------------------------------------------------------------------------
# Conv wrappers for the strided fallback path (glue in JAX, compute in Pallas)
# ---------------------------------------------------------------------------
def conv1x1_bn(x_nhwc, w_cin_cout, scale, shift, *, stride=1, relu=False,
               residual_nhwc=None, out_dtype=jnp.float32):
    """1x1 conv + folded BN + optional residual/relu (stride via input subsampling)."""
    # TODO(synk): fold the H stride into the BlockSpec index_map (W stride still needs a
    # gather); this wrapper slice is only hit on the single strided block of a stage.
    if stride > 1:
        x_nhwc = x_nhwc[:, ::stride, ::stride, :]
    N, H, W, Cin = x_nhwc.shape
    Cout = w_cin_cout.shape[1]
    M = N * H * W
    out = _gemm_bn(x_nhwc.reshape(M, Cin), w_cin_cout, scale, shift,
                   relu=relu, residual=residual_nhwc, out_dtype=out_dtype)
    return out.reshape(N, H, W, Cout)


def conv3x3_bn(x_nhwc, w_9cin_cout, scale, shift, *, stride=1, dilation=1, relu=False,
               out_dtype=jnp.float32):
    """Strided 3x3 conv fallback (only used by the first block of a strided stage).

    TODO(synk): fuse the strided block too (needs strided in-kernel tap reads); the
    im2col HBM amplification is paid on at most one block per stage."""
    N, H, W, Cin = x_nhwc.shape
    Cout = w_9cin_cout.shape[1]
    d, s = dilation, stride
    Ho = (H - 1) // s + 1
    Wo = (W - 1) // s + 1
    M = N * Ho * Wo
    xp = jnp.pad(x_nhwc.astype(jnp.bfloat16), ((0, 0), (d, d), (d, d), (0, 0)))
    taps = []
    for kh in range(3):
        for kw in range(3):
            h0, w0 = kh * d, kw * d
            tap = xp[:, h0:h0 + (Ho - 1) * s + 1:s, w0:w0 + (Wo - 1) * s + 1:s, :]
            taps.append(tap.reshape(M, Cin))
    x2d = jnp.concatenate(taps, axis=-1)  # (M, 9*Cin)
    out = _gemm_bn(x2d, w_9cin_cout, scale, shift, relu=relu, out_dtype=out_dtype)
    return out.reshape(N, Ho, Wo, Cout)


# ---------------------------------------------------------------------------
# ResBlock / ResStage forward (bottleneck_transform), NHWC throughout
# ---------------------------------------------------------------------------
def res_block_forward_nhwc(x_nhwc, shift_buf_nhwc, p, *, stride, has_branch1,
                           dilation=1, stride_1x1=False):
    C = x_nhwc.shape[-1]
    c8 = C // 8
    x1 = x_nhwc[..., :c8]
    x2 = x_nhwc[..., c8:]
    b2_in = jnp.concatenate([shift_buf_nhwc, x2], axis=-1)  # (N, H, W, C)

    str1x1, str3x3 = (stride, 1) if stride_1x1 else (1, stride)

    # Residual path, produced/kept in bf16 (halves residual HBM traffic; precision is
    # already bounded by the bf16 branch2 intermediates).
    if has_branch1:
        res = conv1x1_bn(x_nhwc, p['br1_w'], p['br1_scale'], p['br1_shift'],
                         stride=stride, relu=False, out_dtype=jnp.bfloat16)
    else:
        res = x_nhwc.astype(jnp.bfloat16)

    if str1x1 == 1 and str3x3 == 1:
        # Fast path: the whole bottleneck (a -> in-VMEM 3x3 taps -> b -> c + residual
        # + ReLU) in one pallas_call; 'a'/'b' intermediates never leave VMEM.
        out = fused_bottleneck_block(b2_in, res, p, dilation=dilation,
                                     out_dtype=jnp.float32)
    else:
        # Strided fallback: per-conv GEMM kernels with bf16 intermediates.
        a = conv1x1_bn(b2_in, p['a_w'], p['a_scale'], p['a_shift'],
                       stride=str1x1, relu=True, out_dtype=jnp.bfloat16)
        b = conv3x3_bn(a, p['b_w9'], p['b_scale'], p['b_shift'],
                       stride=str3x3, dilation=dilation, relu=True,
                       out_dtype=jnp.bfloat16)
        out = conv1x1_bn(b, p['c_w'], p['c_scale'], p['c_shift'], stride=1, relu=True,
                         residual_nhwc=res, out_dtype=jnp.float32)
    return out, x1


def res_stage_forward(inputs, shift_buffer, stage_params, stage_cfg):
    """Public interface is NCHW (PyTorch convention); NHWC inside the stage."""
    output, out_buffer = [], []
    for pathway in range(len(stage_params)):
        x = jnp.transpose(inputs[pathway], (0, 2, 3, 1))  # NCHW -> NHWC once per stage
        for i, (p, cfg) in enumerate(zip(stage_params[pathway], stage_cfg[pathway])):
            sbuf = jnp.transpose(shift_buffer[i], (0, 2, 3, 1))
            x, s = res_block_forward_nhwc(x, sbuf, p, **cfg)
            out_buffer.append(jnp.transpose(s, (0, 3, 1, 2)))
        output.append(jnp.transpose(x, (0, 3, 1, 2)))
    return output, out_buffer


# ---------------------------------------------------------------------------
# Deterministic parameter construction (mirrors the module's __init__ shapes)
# ---------------------------------------------------------------------------
def _make_bn(key, c):
    k1, k2, k3, k4 = jax.random.split(key, 4)
    gamma = 1.0 + 0.1 * jax.random.normal(k1, (c,), jnp.float32)
    beta = 0.1 * jax.random.normal(k2, (c,), jnp.float32)
    mean = 0.1 * jax.random.normal(k3, (c,), jnp.float32)
    var = 1.0 + 0.5 * jax.random.uniform(k4, (c,), jnp.float32)
    scale = gamma / jnp.sqrt(var + EPS)
    shift = beta - mean * scale
    return scale, shift


def _make_conv(key, cout, cin, k):
    return 0.1 * jax.random.normal(key, (cout, cin, k, k), jnp.float32)  # OIHW (PyTorch)


def build_res_stage(key, dim_in, dim_out, stride, num_blocks, dim_inner, num_groups,
                    nonlocal_inds, dilation):
    stage_params, stage_cfg = [], []
    for pw in range(len(num_blocks)):
        assert num_groups[pw] == 1, "num_groups > 1 not implemented"
        assert len(nonlocal_inds[pw]) == 0, "Nonlocal blocks not implemented"
        blocks_p, blocks_c = [], []
        for i in range(num_blocks[pw]):
            d_in = dim_in[pw] if i == 0 else dim_out[pw]
            d_out = dim_out[pw]
            d_inner = dim_inner[pw]
            st = stride[pw] if i == 0 else 1
            has_b1 = (d_in != d_out) or (st != 1)
            key, *ks = jax.random.split(key, 9)
            p = {}
            # bottleneck a: 1x1 d_in -> d_inner
            p['a_w_oihw'] = _make_conv(ks[0], d_inner, d_in, 1)
            p['a_w'] = p['a_w_oihw'][:, :, 0, 0].T.astype(jnp.bfloat16)
            p['a_scale'], p['a_shift'] = _make_bn(ks[1], d_inner)
            # bottleneck b: 3x3 d_inner -> d_inner; both (9, Cin, Cout) (fused path)
            # and (9*Cin, Cout) (im2col fallback) layouts
            p['b_w_oihw'] = _make_conv(ks[2], d_inner, d_inner, 3)
            b_w_k = jnp.transpose(p['b_w_oihw'], (2, 3, 1, 0))  # (3,3,I,O)
            p['b_w3x3'] = b_w_k.reshape(9, d_inner, d_inner).astype(jnp.bfloat16)
            p['b_w9'] = b_w_k.reshape(9 * d_inner, d_inner).astype(jnp.bfloat16)
            p['b_scale'], p['b_shift'] = _make_bn(ks[3], d_inner)
            # bottleneck c: 1x1 d_inner -> d_out
            p['c_w_oihw'] = _make_conv(ks[4], d_out, d_inner, 1)
            p['c_w'] = p['c_w_oihw'][:, :, 0, 0].T.astype(jnp.bfloat16)
            p['c_scale'], p['c_shift'] = _make_bn(ks[5], d_out)
            if has_b1:
                p['br1_w_oihw'] = _make_conv(ks[6], d_out, d_in, 1)
                p['br1_w'] = p['br1_w_oihw'][:, :, 0, 0].T.astype(jnp.bfloat16)
                p['br1_scale'], p['br1_shift'] = _make_bn(ks[7], d_out)
            blocks_p.append(p)
            blocks_c.append(dict(stride=st, has_branch1=has_b1, dilation=dilation[pw],
                                 stride_1x1=False))
        stage_params.append(blocks_p)
        stage_cfg.append(blocks_c)
    return stage_params, stage_cfg, key


# ---------------------------------------------------------------------------
# Pure-JAX (lax.conv, f32 HIGHEST) reference for correctness checking
# ---------------------------------------------------------------------------
def _ref_conv(x, w_oihw, stride, padding, dilation=1):
    return jax.lax.conv_general_dilated(
        x, w_oihw, window_strides=(stride, stride),
        padding=[(padding, padding), (padding, padding)],
        rhs_dilation=(dilation, dilation),
        dimension_numbers=('NCHW', 'OIHW', 'NCHW'),
        precision=jax.lax.Precision.HIGHEST)


def _ref_bn(x, scale, shift):
    return x * scale[None, :, None, None] + shift[None, :, None, None]


def _ref_block(x, sbuf, p, cfg):
    c = x.shape[1]
    x1, x2 = x[:, :c // 8], x[:, c // 8:]
    b2in = jnp.concatenate([sbuf, x2], axis=1)
    st = cfg['stride']
    dil = cfg['dilation']
    str1x1, str3x3 = (st, 1) if cfg['stride_1x1'] else (1, st)
    a = jnp.maximum(_ref_bn(_ref_conv(b2in, p['a_w_oihw'], str1x1, 0),
                            p['a_scale'], p['a_shift']), 0.0)
    b = jnp.maximum(_ref_bn(_ref_conv(a, p['b_w_oihw'], str3x3, dil, dil),
                            p['b_scale'], p['b_shift']), 0.0)
    cc = _ref_bn(_ref_conv(b, p['c_w_oihw'], 1, 0), p['c_scale'], p['c_shift'])
    if cfg['has_branch1']:
        res = _ref_bn(_ref_conv(x, p['br1_w_oihw'], st, 0), p['br1_scale'], p['br1_shift'])
    else:
        res = x
    return jnp.maximum(cc + res, 0.0), x1


def _ref_stage(inputs, shift_buffer, stage_params, stage_cfg):
    output, out_buffer = [], []
    for pw in range(len(stage_params)):
        x = inputs[pw]
        for i, (p, cfg) in enumerate(zip(stage_params[pw], stage_cfg[pw])):
            x, s = _ref_block(x, shift_buffer[i], p, cfg)
            out_buffer.append(s)
        output.append(x)
    return output, out_buffer


# ---------------------------------------------------------------------------
if __name__ == "__main__":
    key = jax.random.PRNGKey(0)

    # Single pathway, 2 bottleneck blocks:
    #   block 0: stride 2 + projection branch1 (strided fallback path),
    #   block 1: stride 1 + identity residual (fused single-kernel path).
    N, H, W = 2, 16, 16
    dim_in, dim_out, stride = [8], [16], [2]
    num_blocks, dim_inner = [2], [4]
    num_groups, dilation = [1], [1]
    nonlocal_inds = [[]]

    stage_params, stage_cfg, key = build_res_stage(
        key, dim_in, dim_out, stride, num_blocks, dim_inner, num_groups,
        nonlocal_inds, dilation)

    kx, ks0, ks1 = jax.random.split(key, 3)
    x = jax.random.normal(kx, (N, dim_in[0], H, W), jnp.float32)
    # shift_buffer[i] has (input channels of block i) // 8 channels at block i's input
    # resolution.
    shift_buffer = [
        jax.random.normal(ks0, (N, dim_in[0] // 8, H, W), jnp.float32),
        jax.random.normal(ks1, (N, dim_out[0] // 8, H // stride[0], W // stride[0]),
                          jnp.float32),
    ]

    outputs, out_buffer = res_stage_forward([x], shift_buffer, stage_params, stage_cfg)
    jax.block_until_ready(outputs)
    jax.block_until_ready(out_buffer)

    ref_outputs, ref_out_buffer = _ref_stage([x], shift_buffer, stage_params, stage_cfg)

    # bf16 inputs/weights/residuals with f32 accumulation => loose tolerance vs f32
    # HIGHEST reference.
    for got, want in zip(outputs, ref_outputs):
        assert got.shape == want.shape, (got.shape, want.shape)
        np.testing.assert_allclose(np.asarray(got), np.asarray(want), rtol=2e-2, atol=2e-2)
    for got, want in zip(out_buffer, ref_out_buffer):
        assert got.shape == want.shape, (got.shape, want.shape)
        np.testing.assert_allclose(np.asarray(got), np.asarray(want), rtol=2e-2, atol=2e-2)

    print("KERNEL_OK")
</pallas_src>

<mosaic_0001>
module attributes {stable_mosaic.version = 11 : i64} {
  func.func @_gemm_bn_kernel_single_k(%arg0: i32, %arg1: memref<64x8xbf16, #tpu.memory_space<vmem>>, %arg2: memref<8x16xbf16, #tpu.memory_space<vmem>>, %arg3: memref<1x16xf32, #tpu.memory_space<vmem>>, %arg4: memref<1x16xf32, #tpu.memory_space<vmem>>, %arg5: memref<64x16xbf16, #tpu.memory_space<vmem>>) attributes {dimension_semantics = [#tpu.dimension_semantics<parallel>], iteration_bounds = array<i64: 2>, scalar_prefetch = 0 : i64, scratch_operands = 0 : i64, tpu.core_type = #tpu.core_type<tc>, window_params = [{transform_indices = @transform_0, window_bounds = array<i64: 64, 8>}, {pipeline_mode = #tpu.pipeline_mode<synchronous>, transform_indices = @transform_1, window_bounds = array<i64: 8, 16>}, {pipeline_mode = #tpu.pipeline_mode<synchronous>, transform_indices = @transform_2, window_bounds = array<i64: 1, 16>}, {pipeline_mode = #tpu.pipeline_mode<synchronous>, transform_indices = @transform_3, window_bounds = array<i64: 1, 16>}, {transform_indices = @transform_4, window_bounds = array<i64: 64, 16>}]} {
    %c0 = arith.constant 0 : index
    %c0_0 = arith.constant 0 : index
    %0 = vector.load %arg1[%c0, %c0_0] : memref<64x8xbf16, #tpu.memory_space<vmem>>, vector<64x8xbf16>
    %c0_1 = arith.constant 0 : index
    %c0_2 = arith.constant 0 : index
    %1 = vector.load %arg2[%c0_1, %c0_2] : memref<8x16xbf16, #tpu.memory_space<vmem>>, vector<8x16xbf16>
    %cst = arith.constant dense<0.000000e+00> : vector<64x16xf32>
    %2 = tpu.matmul %0, %1, %cst {dimension_numbers = #tpu.dot_dimension_numbers<[1], [0], [0], [1], [0, 0, 1, 1], [], []>} : vector<64x8xbf16>, vector<8x16xbf16>, vector<64x16xf32> -> vector<64x16xf32>
    %c0_3 = arith.constant 0 : index
    %c0_4 = arith.constant 0 : index
    %3 = vector.load %arg3[%c0_3, %c0_4] : memref<1x16xf32, #tpu.memory_space<vmem>>, vector<1x16xf32>
    %4 = vector.broadcast %3 : vector<1x16xf32> to vector<64x16xf32>
    %5 = arith.mulf %2, %4 : vector<64x16xf32>
    %c0_5 = arith.constant 0 : index
    %c0_6 = arith.constant 0 : index
    %6 = vector.load %arg4[%c0_5, %c0_6] : memref<1x16xf32, #tpu.memory_space<vmem>>, vector<1x16xf32>
    %7 = vector.broadcast %6 : vector<1x16xf32> to vector<64x16xf32>
    %8 = arith.addf %5, %7 : vector<64x16xf32>
    %9 = arith.truncf %8 : vector<64x16xf32> to vector<64x16xbf16>
    %c0_7 = arith.constant 0 : index
    %c0_8 = arith.constant 0 : index
    %10 = vector.load %arg5[%c0_7, %c0_8] : memref<64x16xbf16, #tpu.memory_space<vmem>>, vector<64x16xbf16>
    tpu.vector_store %arg5[%c0_7, %c0_8], %9 {strides = array<i32>} : memref<64x16xbf16, #tpu.memory_space<vmem>>, vector<64x16xbf16>,
    return
  }
  func.func @transform_0(%arg0: i32) -> (i32, i32) {
    %c0_i32 = arith.constant 0 : i32
    %c0_i32_0 = arith.constant 0 : i32
    return %arg0, %c0_i32 : i32, i32
  }
  func.func @transform_1(%arg0: i32) -> (i32, i32) {
    %c0_i32 = arith.constant 0 : i32
    %c0_i32_0 = arith.constant 0 : i32
    %c0_i32_1 = arith.constant 0 : i32
    return %c0_i32, %c0_i32_0 : i32, i32
  }
  func.func @transform_2(%arg0: i32) -> (i32, i32) {
    %c0_i32 = arith.constant 0 : i32
    %c0_i32_0 = arith.constant 0 : i32
    %c0_i32_1 = arith.constant 0 : i32
    return %c0_i32, %c0_i32_0 : i32, i32
  }
  func.func @transform_3(%arg0: i32) -> (i32, i32) {
    %c0_i32 = arith.constant 0 : i32
    %c0_i32_0 = arith.constant 0 : i32
    %c0_i32_1 = arith.constant 0 : i32
    return %c0_i32, %c0_i32_0 : i32, i32
  }
  func.func @transform_4(%arg0: i32) -> (i32, i32) {
    %c0_i32 = arith.constant 0 : i32
    %c0_i32_0 = arith.constant 0 : i32
    return %arg0, %c0_i32 : i32, i32
  }
}

</mosaic_0001>

<llo_original>
// kernel: tpu_custom_call.1
$region0: #{tpu_custom_call.1}
  #allocation0 [shape = 'u32[]', space=smem, size = 0x4, offset = 0x4, fixed_abs, tag = 'smem constant byte address 0x4 - core index']
  #allocation1 [shape = 'u32[144,128]{1,0:T(1,128)}', space=vmem, size = 0x12000, scoped, tag = 'internal scratch']
  %s0 = inlined_call_operand.vmem [shape: bf16[128,8], index: 0, kind: input, shape index: {}]
  %s1 = inlined_call_operand.vmem [shape: bf16[8,16], index: 1, kind: input, shape index: {}]
  %s2 = inlined_call_operand.vmem [shape: f32[1,16], index: 2, kind: input, shape index: {}]
  %s3 = inlined_call_operand.vmem [shape: f32[1,16], index: 3, kind: input, shape index: {}]
  %s4 = inlined_call_operand.vmem [shape: bf16[128,16], index: 4, kind: output, shape index: {}]
  %s5 = sld [smem:[#allocation0]]
  $region49: #{tpu_custom_call.1} parent=0
    _
  %s7 = ssub.s32 1, %s5
  %s8 = scalar_select 0, %s7, %s5
  loop: start=0, step=1, limit=4
  $region2: #{tpu_custom_call.1} parent=0 // loop_pre_header
    _
  $region3: #{tpu_custom_call.1} parent=0 // loop_header
    %s10 = sphi 0, %s14
    %p11 = scmp.ge.s32.totalorder %s10, 4
    %s20 = sphi 0, %s22
    %s23 = sphi 0, %s20
    %s24 = sphi 0, %s23
    %s40 = sphi 0, %s24
    %s44 = sphi 0, %s44
    %s46 = sphi 0, %s44
    %s47 = sphi 0, %s46
    %s61 = sphi 0, %s47
    %s65 = sphi 0, %s65
    %s67 = sphi 0, %s65
    %s68 = sphi 0, %s67
    %s82 = sphi 0, %s68
    %s86 = sphi 0, %s86
    %s88 = sphi 0, %s86
    %s89 = sphi 0, %s88
    %s103 = sphi 0, %s89
    %s109 = sphi 0, %s111
    %s112 = sphi 0, %s109
    %s113 = sphi 0, %s112
    %s129 = sphi 0, %s113
  $region4: #{tpu_custom_call.1} parent=0 // loop_header_branch
    %13 = sbr.rel (%p11) target = $region8
  $region5: #{tpu_custom_call.1} parent=0 // loop_body
    %s15 = ssub.s32 %s10, 1
    %s16 = ssub.s32 %s10, 2
    %s17 = sadd.s32 %s10, 1
    %s18 = ssub.s32 %s10, %s17
    %p19 = scmp.eq.s32.totalorder %s18, 0
    %s21 = sadd.s32 %s20, 1
    %s22 = scalar_select %p19, %s20, %s21
    %p25 = pneg %p19
    %p26 = scmp.eq.s32.totalorder %s10, 1
    %p27 = por %p25, %p26
    %p28 = scmp.ne.s32.totalorder %s20, %s23
    %p29 = scmp.eq.s32.totalorder %s10, 0
    %p30 = por %p28, %p29
    %p31 = scmp.ne.s32.totalorder %s20, %s23
    %p32 = scmp.eq.s32.totalorder %s15, 1
    %p33 = por %p31, %p32
    %p34 = scmp.ne.s32.totalorder %s23, %s24
    %p35 = scmp.eq.s32.totalorder %s15, 0
    %p36 = por %p34, %p35
    %p37 = scmp.ne.s32.totalorder %s23, %s24
    %p38 = scmp.eq.s32.totalorder %s16, 1
    %p39 = por %p37, %p38
    %p41 = scmp.ne.s32.totalorder %s24, %s40
    %p42 = scmp.eq.s32.totalorder %s16, 0
    %p43 = por %p41, %p42
    %s45 = sadd.s32 %s44, 1
    %p48 = scmp.eq.s32.totalorder %s10, 1
    %p49 = scmp.ne.s32.totalorder %s44, %s46
    %p50 = scmp.eq.s32.totalorder %s10, 0
    %p51 = por %p49, %p50
    %p52 = scmp.ne.s32.totalorder %s44, %s46
    %p53 = scmp.eq.s32.totalorder %s15, 1
    %p54 = por %p52, %p53
    %p55 = scmp.ne.s32.totalorder %s46, %s47
    %p56 = scmp.eq.s32.totalorder %s15, 0
    %p57 = por %p55, %p56
    %p58 = scmp.ne.s32.totalorder %s46, %s47
    %p59 = scmp.eq.s32.totalorder %s16, 1
    %p60 = por %p58, %p59
    %p62 = scmp.ne.s32.totalorder %s47, %s61
    %p63 = scmp.eq.s32.totalorder %s16, 0
    %p64 = por %p62, %p63
    %s66 = sadd.s32 %s65, 1
    %p69 = scmp.eq.s32.totalorder %s10, 1
    %p70 = scmp.ne.s32.totalorder %s65, %s67
    %p71 = scmp.eq.s32.totalorder %s10, 0
    %p72 = por %p70, %p71
    %p73 = scmp.ne.s32.totalorder %s65, %s67
    %p74 = scmp.eq.s32.totalorder %s15, 1
    %p75 = por %p73, %p74
    %p76 = scmp.ne.s32.totalorder %s67, %s68
    %p77 = scmp.eq.s32.totalorder %s15, 0
    %p78 = por %p76, %p77
    %p79 = scmp.ne.s32.totalorder %s67, %s68
    %p80 = scmp.eq.s32.totalorder %s16, 1
    %p81 = por %p79, %p80
    %p83 = scmp.ne.s32.totalorder %s68, %s82
    %p84 = scmp.eq.s32.totalorder %s16, 0
    %p85 = por %p83, %p84
    %s87 = sadd.s32 %s86, 1
    %p90 = scmp.eq.s32.totalorder %s10, 1
    %p91 = scmp.ne.s32.totalorder %s86, %s88
    %p92 = scmp.eq.s32.totalorder %s10, 0
    %p93 = por %p91, %p92
    %p94 = scmp.ne.s32.totalorder %s86, %s88
    %p95 = scmp.eq.s32.totalorder %s15, 1
    %p96 = por %p94, %p95
    %p97 = scmp.ne.s32.totalorder %s88, %s89
    %p98 = scmp.eq.s32.totalorder %s15, 0
    %p99 = por %p97, %p98
    %p100 = scmp.ne.s32.totalorder %s88, %s89
    %p101 = scmp.eq.s32.totalorder %s16, 1
    %p102 = por %p100, %p101
    %p104 = scmp.ne.s32.totalorder %s89, %s103
    %p105 = scmp.eq.s32.totalorder %s16, 0
    %p106 = por %p104, %p105
    %s107 = ssub.s32 %s10, %s17
    %p108 = scmp.eq.s32.totalorder %s107, 0
    %s110 = sadd.s32 %s109, 1
    %s111 = scalar_select %p108, %s109, %s110
    %p114 = pneg %p108
    %p115 = scmp.eq.s32.totalorder %s10, 1
    %p116 = por %p114, %p115
    %p117 = scmp.ne.s32.totalorder %s109, %s112
    %p118 = scmp.eq.s32.totalorder %s10, 0
    %p119 = por %p117, %p118
    %p120 = scmp.ne.s32.totalorder %s109, %s112
    %p121 = scmp.eq.s32.totalorder %s15, 1
    %p122 = por %p120, %p121
    %p123 = scmp.ne.s32.totalorder %s112, %s113
    %p124 = scmp.eq.s32.totalorder %s15, 0
    %p125 = por %p123, %p124
    %p126 = scmp.ne.s32.totalorder %s112, %s113
    %p127 = scmp.eq.s32.totalorder %s16, 1
    %p128 = por %p126, %p127
    %p130 = scmp.ne.s32.totalorder %s113, %s129
    %p131 = scmp.eq.s32.totalorder %s16, 0
    %p132 = por %p130, %p131
    %p133 = scmp.le.s32.totalorder 1, %s10
    %p134 = scmp.lt.s32.totalorder %s10, 3
    %p135 = pnand %p133, %p134
    %p136 = pneg %p135
    // Predicated region
    $region9: #{tpu_custom_call.1} parent=5 // pred_check
      _
    $region10: #{tpu_custom_call.1} parent=5 // pred_check_branch
      %138 = sbr.rel (%p135) target = $region12
    $region11: #{tpu_custom_call.1} parent=5 // pred_region
      %s139 = ssub.s32 %s10, 1
      // Predicated region
      $region13: #{tpu_custom_call.1} parent=11 // pred_check
        %p140 = pneg %p57
      $region14: #{tpu_custom_call.1} parent=11 // pred_check_branch
        %142 = sbr.rel (%p140) target = $region16
      $region15: #{tpu_custom_call.1} parent=11 // pred_region
        _
      $region16: #{tpu_custom_call.1} parent=11 // pred_fallthru
        _
      // Predicated region
      $region17: #{tpu_custom_call.1} parent=11 // pred_check
        %p143 = pneg %p78
      $region18: #{tpu_custom_call.1} parent=11 // pred_check_branch
        %145 = sbr.rel (%p143) target = $region20
      $region19: #{tpu_custom_call.1} parent=11 // pred_region
        _
      $region20: #{tpu_custom_call.1} parent=11 // pred_fallthru
        _
      // Predicated region
      $region21: #{tpu_custom_call.1} parent=11 // pred_check
        %p146 = pneg %p99
      $region22: #{tpu_custom_call.1} parent=11 // pred_check_branch
        %148 = sbr.rel (%p146) target = $region24
      $region23: #{tpu_custom_call.1} parent=11 // pred_region
        _
      $region24: #{tpu_custom_call.1} parent=11 // pred_fallthru
        _
    $region12: #{tpu_custom_call.1} parent=5 // pred_fallthru
      _
    %p149 = scmp.lt.s32.totalorder %s10, 2
    // Predicated region
    $region25: #{tpu_custom_call.1} parent=5 // pred_check
      %p150 = pneg %p149
    $region26: #{tpu_custom_call.1} parent=5 // pred_check_branch
      %152 = sbr.rel (%p150) target = $region28
    $region27: #{tpu_custom_call.1} parent=5 // pred_region
      // Predicated region
      $region29: #{tpu_custom_call.1} parent=27 // pred_check
        %p153 = pneg %p30
      $region30: #{tpu_custom_call.1} parent=27 // pred_check_branch
        %155 = sbr.rel (%p153) target = $region32
      $region31: #{tpu_custom_call.1} parent=27 // pred_region
        %s156 = smul.u32 8, %s10
        %p157 = scmp.lt.s32.totalorder %s156, 15
        %s158 = scalar_select %p157, %s156, 15
        %s159 = smul.addr %s158, 4
        %s160 = scalar_lea.vmem %s0, %s159
        %s161 = smul.u32 8, %s10
      $region32: #{tpu_custom_call.1} parent=27 // pred_fallthru
        _
    $region28: #{tpu_custom_call.1} parent=5 // pred_fallthru
      _
    %p162 = scmp.le.s32.totalorder 1, %s10
    %p163 = scmp.lt.s32.totalorder %s10, 3
    %p164 = pnand %p162, %p163
    %p165 = pneg %p164
    // Predicated region
    $region33: #{tpu_custom_call.1} parent=5 // pred_check
      _
    $region34: #{tpu_custom_call.1} parent=5 // pred_check_branch
      %167 = sbr.rel (%p164) target = $region36
    $region35: #{tpu_custom_call.1} parent=5 // pred_region
      %s168 = ssub.s32 %s10, 1
      %s169 = smul.u32 8, %s15
      %p170 = scmp.lt.s32.totalorder %s169, 15
      %s171 = scalar_select %p170, %s169, 15
      %s172 = smul.addr %s171, 4
      %s173 = scalar_lea.vmem %s0, %s172
      %p174 = pneg %p36
      %p175 = pneg %p33
      %p176 = pneg %p57
      %p177 = pneg %p54
      %p178 = pneg %p78
      %p179 = pneg %p75
      %p180 = pneg %p99
      %p181 = pneg %p96
      %p182 = pneg %p125
      %p183 = pneg %p122
      %s184 = smul.u32 8, %s15
      %p185 = scmp.lt.s32.totalorder %s184, 15
      %s186 = scalar_select %p185, %s184, 15
      %s187 = smul.addr %s186, 4
      %s188 = scalar_lea.vmem %s4, %s187
      %s189 = smul.u32 8, %s15
      %p190 = scmp.lt.s32.totalorder %s189, 15
      %s191 = scalar_select %p190, %s189, 15
      %s192 = smul.addr %s191, 4
      %s193 = scalar_lea.vmem %s0, %s192
      %s194 = smul.u32 8, %s15
      %s195 = smul.u32 8, %s15
      %p196 = scmp.lt.s32.totalorder %s195, 15
      %s197 = scalar_select %p196, %s195, 15
      %s198 = smul.addr %s197, 4
      %s199 = scalar_lea.vmem %s4, %s198
      %s200 = smul.u32 8, %s15
      %v202 = vld [vmem:[%s193] sm:$0xf]
      %v203 = vld [vmem:[%s193 + $0x4] sm:$0xf]
      %v204 = vld [vmem:[%s193 + $0x8] sm:$0xf]
      %v205 = vld [vmem:[%s193 + $0xc] sm:$0xf]
      %v206 = vld [vmem:[%s193 + $0x10] sm:$0xf]
      %v207 = vld [vmem:[%s193 + $0x14] sm:$0xf]
      %v208 = vld [vmem:[%s193 + $0x18] sm:$0xf]
      %v209 = vld [vmem:[%s193 + $0x1c] sm:$0xf]
      %v210 = vld [vmem:[%s1] sm:$0xf]
      %v219 = vunpack.c.l.b16 %v202
      %v220 = vunpack.c.l.b16 %v203
      %v221 = vunpack.c.l.b16 %v204
      %v222 = vunpack.c.l.b16 %v205
      %v223 = vunpack.c.l.b16 %v206
      %v224 = vunpack.c.l.b16 %v207
      %v225 = vunpack.c.l.b16 %v208
      %v226 = vunpack.c.l.b16 %v209
      %v227 = vpack.c.b16 %v220, %v219
      %v228 = vpack.c.b16 %v222, %v221
      %v229 = vpack.c.b16 %v224, %v223
      %v230 = vpack.c.b16 %v226, %v225
      %vm231 = vcmask 64512
      %v233 = vsel %vm231, %v227, 0
      %v236 = vsel %vm231, %v228, 0
      %v239 = vsel %vm231, %v229, 0
      %v242 = vsel %vm231, %v230, 0
      %vm244 = vcmask 1043456
      %v246 = vsel %vm244, %v210, 0
      %248 = vmatprep.subr.bf16.mxu0 0
      %249 = vmatpush1.bf16.msra.mxu0 %v246
      %250 = vmatprep.subr.bf16.mxu0 0
      %251 = vmatpush1.bf16.msra.mxu0 0
      %252 = vmatprep.subr.bf16.mxu0 0
      %253 = vmatpush1.bf16.msra.mxu0 0
      %254 = vmatprep.subr.bf16.mxu0 0
      %255 = vmatpush1.bf16.msra.mxu0 0
      %256 = vmatprep.subr.bf16.mxu0 0
      %257 = vmatpush1.bf16.msra.mxu0 0
      %258 = vmatprep.subr.bf16.mxu0 0
      %259 = vmatpush1.bf16.msra.mxu0 0
      %260 = vmatprep.subr.bf16.mxu0 0
      %261 = vmatpush1.bf16.msra.mxu0 0
      %262 = vmatprep.subr.bf16.mxu0 0
      %263 = vmatpush1.bf16.msra.mxu0 0
      %264 = vmatprep.subr.bf16.mxu0 0
      %265 = vmatpush1.bf16.msra.mxu0 0
      %266 = vmatprep.subr.bf16.mxu0 0
      %267 = vmatpush1.bf16.msra.mxu0 0
      %268 = vmatprep.subr.bf16.mxu0 0
      %269 = vmatpush1.bf16.msra.mxu0 0
      %270 = vmatprep.subr.bf16.mxu0 0
      %271 = vmatpush1.bf16.msra.mxu0 0
      %272 = vmatprep.subr.bf16.mxu0 0
      %273 = vmatpush1.bf16.msra.mxu0 0
      %274 = vmatprep.subr.bf16.mxu0 0
      %275 = vmatpush1.bf16.msra.mxu0 0
      %276 = vmatprep.subr.bf16.mxu0 0
      %277 = vmatpush1.bf16.msra.mxu0 0
      %278 = vmatprep.subr.bf16.mxu0 0
      %279 = vmatpush1.bf16.msra.mxu0 0
      %280 = vmatprep.mubr.bf16.mxu0 0
      %281 = vmatmul.mubr.bf16.gmra.mrb[0].mxu0 %v233
      %v282 = vpop.f32.mrb[0].mxu0
      %v283 = vadd.f32 0.0, %v282
      %v284 = vpop.f32.mrb[0].mxu0
      %v285 = vpop.f32.mrb[0].mxu0
      %v286 = vadd.f32 0.0, %v285
      %v287 = vpop.f32.mrb[0].mxu0
      %288 = vmatprep.mubr.bf16.mxu0 0
      %289 = vmatmul.mubr.bf16.gmra.mrb[0].mxu0 %v236
      %v290 = vpop.f32.mrb[0].mxu0
      %v291 = vadd.f32 0.0, %v290
      %v292 = vpop.f32.mrb[0].mxu0
      %v293 = vpop.f32.mrb[0].mxu0
      %v294 = vadd.f32 0.0, %v293
      %v295 = vpop.f32.mrb[0].mxu0
      %296 = vmatprep.mubr.bf16.mxu0 0
      %297 = vmatmul.mubr.bf16.gmra.mrb[0].mxu0 %v239
      %v298 = vpop.f32.mrb[0].mxu0
      %v299 = vadd.f32 0.0, %v298
      %v300 = vpop.f32.mrb[0].mxu0
      %v301 = vpop.f32.mrb[0].mxu0
      %v302 = vadd.f32 0.0, %v301
      %v303 = vpop.f32.mrb[0].mxu0
      %304 = vmatprep.mubr.bf16.mxu0 0
      %305 = vmatmul.mubr.bf16.gmra.mrb[0].mxu0 %v242
      %v306 = vpop.f32.mrb[0].mxu0
      %v307 = vadd.f32 0.0, %v306
      %v308 = vpop.f32.mrb[0].mxu0
      %v309 = vpop.f32.mrb[0].mxu0
      %v310 = vadd.f32 0.0, %v309
      %v311 = vpop.f32.mrb[0].mxu0
      %312 = vdwg.mxu0
      %v313 = vld [vmem:[%s2] sm:$0x1]
      %v315 = vlaneseq
      %v316 = vshrl.u32 %v315, 7
      %v317 = vsub.s32 0, %v316
      %v318 = vrot.slane %v313, %v317
      %v320 = vmul.f32 %v283, %v318
      %v321 = vmul.f32 %v286, %v318
      %v322 = vmul.f32 %v291, %v318
      %v323 = vmul.f32 %v294, %v318
      %v324 = vmul.f32 %v299, %v318
      %v325 = vmul.f32 %v302, %v318
      %v326 = vmul.f32 %v307, %v318
      %v327 = vmul.f32 %v310, %v318
      %v328 = vld [vmem:[%s3] sm:$0x1]
      %v330 = vlaneseq
      %v331 = vshrl.u32 %v330, 7
      %v332 = vsub.s32 0, %v331
      %v333 = vrot.slane %v328, %v332
      %v335 = vadd.f32 %v320, %v333
      %v336 = vadd.f32 %v321, %v333
      %v337 = vadd.f32 %v322, %v333
      %v338 = vadd.f32 %v323, %v333
      %v339 = vadd.f32 %v324, %v333
      %v340 = vadd.f32 %v325, %v333
      %v341 = vadd.f32 %v326, %v333
      %v342 = vadd.f32 %v327, %v333
      %v343 = vpack.c.bf16 %v336, %v335
      %v344 = vpack.c.bf16 %v338, %v337
      %v345 = vpack.c.bf16 %v340, %v339
      %v346 = vpack.c.bf16 %v342, %v341
      %v351 = vunpack.c.l.b16 %v343
      %v352 = vunpack.c.h.b16 %v343
      %v353 = vunpack.c.l.b16 %v344
      %v354 = vunpack.c.h.b16 %v344
      %v355 = vunpack.c.l.b16 %v345
      %v356 = vunpack.c.h.b16 %v345
      %v357 = vunpack.c.l.b16 %v346
      %v358 = vunpack.c.h.b16 %v346
      %v359 = vpack.c.b16 %v351, %v351
      %v360 = vpack.c.b16 %v352, %v352
      %v361 = vpack.c.b16 %v353, %v353
      %v362 = vpack.c.b16 %v354, %v354
      %v363 = vpack.c.b16 %v355, %v355
      %v364 = vpack.c.b16 %v356, %v356
      %v365 = vpack.c.b16 %v357, %v357
      %v366 = vpack.c.b16 %v358, %v358
      %vm375 = vcmask 125952
      %376 = vst.msk [vmem:[%s199] sm:$0xf] %vm375, %v359
      %377 = vst.msk [vmem:[%s199 + $0x4] sm:$0xf] %vm375, %v360
      %378 = vst.msk [vmem:[%s199 + $0x8] sm:$0xf] %vm375, %v361
      %379 = vst.msk [vmem:[%s199 + $0xc] sm:$0xf] %vm375, %v362
      %380 = vst.msk [vmem:[%s199 + $0x10] sm:$0xf] %vm375, %v363
      %381 = vst.msk [vmem:[%s199 + $0x14] sm:$0xf] %vm375, %v364
      %382 = vst.msk [vmem:[%s199 + $0x18] sm:$0xf] %vm375, %v365
      %383 = vst.msk [vmem:[%s199 + $0x1c] sm:$0xf] %vm375, %v366
      %s384 = smul.u32 8, %s15
      %p385 = scmp.lt.s32.totalorder %s384, 15
      %s386 = scalar_select %p385, %s384, 15
      %s387 = smul.addr %s386, 4
      %s388 = scalar_lea.vmem %s4, %s387
      // Predicated region
      $region37: #{tpu_custom_call.1} parent=35 // pred_check
        %p389 = pneg %p122
      $region38: #{tpu_custom_call.1} parent=35 // pred_check_branch
        %391 = sbr.rel (%p389) target = $region40
      $region39: #{tpu_custom_call.1} parent=35 // pred_region
        %s392 = smul.u32 8, %s15
      $region40: #{tpu_custom_call.1} parent=35 // pred_fallthru
        _
    $region36: #{tpu_custom_call.1} parent=5 // pred_fallthru
      _
    %p393 = scmp.le.s32.totalorder 2, %s10
    // Predicated region
    $region41: #{tpu_custom_call.1} parent=5 // pred_check
      %p394 = pneg %p393
    $region42: #{tpu_custom_call.1} parent=5 // pred_check_branch
      %396 = sbr.rel (%p394) target = $region44
    $region43: #{tpu_custom_call.1} parent=5 // pred_region
      %s397 = ssub.s32 %s10, 2
      // Predicated region
      $region45: #{tpu_custom_call.1} parent=43 // pred_check
        %p398 = pneg %p128
      $region46: #{tpu_custom_call.1} parent=43 // pred_check_branch
        %400 = sbr.rel (%p398) target = $region48
      $region47: #{tpu_custom_call.1} parent=43 // pred_region
        %s401 = smul.u32 8, %s16
        %p402 = scmp.lt.s32.totalorder %s401, 15
        %s403 = scalar_select %p402, %s401, 15
        %s404 = smul.addr %s403, 4
        %s405 = scalar_lea.vmem %s4, %s404
      $region48: #{tpu_custom_call.1} parent=43 // pred_fallthru
        _
    $region44: #{tpu_custom_call.1} parent=5 // pred_fallthru
      _
  $region6: #{tpu_custom_call.1} parent=0 // loop_footer
    %s14 = sadd.s32 1, %s10
  $region7: #{tpu_custom_call.1} parent=0 // loop_footer_branch
    %9 = sbr.rel target = $region3
  $region8: #{tpu_custom_call.1} parent=0 // loop_exit
    _

</llo_original>
